<compile_context>
chip_gen: v5e
topology: v5e:2x2
jax: 0.10.0
libtpu: 0.0.40
codegen_flags: <defaults>
</compile_context>

<pallas_src>
import functools

import jax
import jax.numpy as jnp
from jax.experimental import pallas as pl
from jax.experimental.pallas import tpu as pltpu

LN_EPS = 1e-5  # PyTorch nn.LayerNorm default


def _round_up(x: int, m: int) -> int:
    return (x + m - 1) // m * m


def _cdiv(a: int, b: int) -> int:
    return (a + b - 1) // b


def _vmem_budget_bytes() -> int:
    """~80% of physical VMEM (64 MiB on v7x, 128 MiB on v5e/v6e); conservative
    fallback if the query is unavailable."""
    try:
        cap = int(pltpu.get_tpu_info().vmem_capacity_bytes)
    except Exception:
        cap = 64 * 1024 * 1024
    return int(0.8 * cap)


# ----------------------------------------------------------------------------
# Kernels
# ----------------------------------------------------------------------------
def _layernorm_f32(x, gamma, beta, s_actual: int):
    """LayerNorm over the real feature width s_actual; x is (TB, S_pad) f32.

    Padded columns of x are guaranteed zero by the wrapper, so the mean needs
    no mask; only `centered` is masked for the variance (and so padded output
    lanes stay zero)."""
    s_pad = x.shape[-1]
    if s_actual == s_pad:
        mean = jnp.mean(x, axis=-1, keepdims=True)
        centered = x - mean
        var = jnp.mean(centered * centered, axis=-1, keepdims=True)
    else:
        inv_n = 1.0 / float(s_actual)
        mean = jnp.sum(x, axis=-1, keepdims=True) * inv_n
        col = jax.lax.broadcasted_iota(jnp.int32, x.shape, 1)
        mask = (col < s_actual).astype(jnp.float32)
        centered = (x - mean) * mask
        var = jnp.sum(centered * centered, axis=-1, keepdims=True) * inv_n
    xn = centered * jax.lax.rsqrt(var + LN_EPS)
    return xn * gamma + beta


def _simba_kernel_resident(x_ref, gamma_ref, beta_ref, w1_ref, b1_ref, w2_ref,
                           b2_ref, o_ref, *, s_actual: int, compute_dtype):
    """1-D grid over batch tiles; both weight matrices resident in VMEM."""
    x = x_ref[...].astype(jnp.float32)
    xn = _layernorm_f32(x, gamma_ref[...].astype(jnp.float32),
                        beta_ref[...].astype(jnp.float32), s_actual)

    # Linear 1 + ReLU (MXU, f32 accumulation).
    h = jnp.dot(xn.astype(compute_dtype), w1_ref[...],
                preferred_element_type=jnp.float32)              # (TB, H_pad)
    h = jnp.maximum(h + b1_ref[...].astype(jnp.float32), 0.0)

    # Linear 2 + bias + residual.
    y = jnp.dot(h.astype(compute_dtype), w2_ref[...],
                preferred_element_type=jnp.float32)              # (TB, S_pad)
    y = y + b2_ref[...].astype(jnp.float32)
    o_ref[...] = (y + x).astype(o_ref.dtype)


def _simba_kernel_hsplit(x_ref, gamma_ref, beta_ref, w1_ref, b1_ref, w2_ref,
                         b2_ref, o_ref, xn_sc, acc_sc, *, s_actual: int,
                         compute_dtype):
    """2-D grid (batch tiles, H blocks).  W1 columns / W2 rows / b1 are tiled
    along the hidden dim; a (TB, S_pad) f32 accumulator lives in scratch and
    the LayerNorm output is cached so it is computed once per batch tile."""
    k = pl.program_id(1)

    @pl.when(k == 0)
    def _():
        x = x_ref[...].astype(jnp.float32)
        xn = _layernorm_f32(x, gamma_ref[...].astype(jnp.float32),
                            beta_ref[...].astype(jnp.float32), s_actual)
        xn_sc[...] = xn.astype(compute_dtype)
        acc_sc[...] = jnp.zeros_like(acc_sc)

    h = jnp.dot(xn_sc[...], w1_ref[...],
                preferred_element_type=jnp.float32)              # (TB, TH)
    h = jnp.maximum(h + b1_ref[...].astype(jnp.float32), 0.0)
    acc_sc[...] += jnp.dot(h.astype(compute_dtype), w2_ref[...],
                           preferred_element_type=jnp.float32)   # (TB, S_pad)

    @pl.when(k == pl.num_programs(1) - 1)
    def _():
        y = acc_sc[...] + b2_ref[...].astype(jnp.float32) \
            + x_ref[...].astype(jnp.float32)
        o_ref[...] = y.astype(o_ref.dtype)


# ----------------------------------------------------------------------------
# Parameter preparation (done once, off the hot path)
# ----------------------------------------------------------------------------
def prepare_simba_params(gamma, beta, w1, b1, w2, b2, *, use_bf16: bool = True):
    S, H = w1.shape
    assert w2.shape == (H, S)
    assert gamma.shape == (S,) and beta.shape == (S,)
    assert b1.shape == (H,) and b2.shape == (S,)

    S_pad = _round_up(S, 128)
    H_pad = _round_up(H, 128)
    compute_dtype = jnp.bfloat16 if use_bf16 else jnp.float32

    # Padded weight rows/cols are zero -> matmuls are exact; LN is masked
    # in-kernel so padded feature lanes never affect the statistics.
    params = {
        "gamma": jnp.pad(gamma, (0, S_pad - S)).reshape(1, S_pad),
        "beta": jnp.pad(beta, (0, S_pad - S)).reshape(1, S_pad),
        "w1": jnp.pad(w1, ((0, S_pad - S), (0, H_pad - H))).astype(compute_dtype),
        "b1": jnp.pad(b1, (0, H_pad - H)).reshape(1, H_pad),
        "w2": jnp.pad(w2, ((0, H_pad - H), (0, S_pad - S))).astype(compute_dtype),
        "b2": jnp.pad(b2, (0, S_pad - S)).reshape(1, S_pad),
        "S": S, "H": H, "S_pad": S_pad, "H_pad": H_pad,
        "compute_dtype": compute_dtype,
    }
    return params


# ----------------------------------------------------------------------------
# Wrapper
# ----------------------------------------------------------------------------
def simba_layer_apply(x, params, *, block_b: int | None = None,
                      block_h: int | None = None, force_h_split: bool = False):
    """x: (B, S) float32 -> (B, S)."""
    B, S = x.shape
    assert S == params["S"], "feature size mismatch with prepared params"
    S_pad, H_pad = params["S_pad"], params["H_pad"]
    compute_dtype = params["compute_dtype"]
    w_itemsize = jnp.dtype(compute_dtype).itemsize

    vmem_budget = _vmem_budget_bytes()
    if block_b is None:
        # Bigger batch tiles on 128 MiB parts (v5e/v6e); 256 on v7x (64 MiB).
        block_b = 512 if vmem_budget >= 80 * 1024 * 1024 else 256

    # ---- balanced batch tiling ----
    n_tiles = max(1, _cdiv(B, block_b))
    TB = _round_up(_cdiv(B, n_tiles), 8)
    if _round_up(B, TB) // TB == 1 and TB >= 256:
        # Keep both v7x TensorCores fed (>= 2 grid steps); harmless elsewhere.
        TB = _round_up(TB // 2, 8)
    B_pad = _round_up(B, TB)

    x_p = x
    if B_pad != B or S_pad != S:
        x_p = jnp.pad(x, ((0, B_pad - B), (0, S_pad - S)))

    # ---- VMEM accounting / path selection ----
    bias_bytes = (3 * S_pad + H_pad) * 4                  # gamma, beta, b1, b2 (f32)
    act_bytes = 2 * 2 * TB * S_pad * 4                    # x + out tiles, double-buffered
    resident_need = (2 * S_pad * H_pad * w_itemsize       # W1 + W2, SINGLE-buffered
                     + bias_bytes + act_bytes
                     + TB * H_pad * 4                     # (TB, H_pad) intermediate
                     + TB * S_pad * 4)                    # misc f32 temps
    use_hsplit = force_h_split or int(resident_need * 1.15) > vmem_budget

    if use_hsplit:
        if block_h is not None:
            TH = block_h
        else:
            TH = 128
            for cand in (2048, 1024, 512, 256, 128):
                if H_pad % cand != 0:
                    continue
                need = (2 * 2 * S_pad * cand * w_itemsize     # W1/W2 tiles, dbl-buffered
                        + bias_bytes + act_bytes
                        + TB * S_pad * (w_itemsize + 4)       # xn + acc scratch
                        + TB * cand * 4)                      # h tile
                if int(need * 1.15) <= vmem_budget:
                    TH = cand
                    break
        assert TH % 128 == 0 and H_pad % TH == 0
        need = (2 * 2 * S_pad * TH * w_itemsize + bias_bytes + act_bytes
                + TB * S_pad * (w_itemsize + 4) + TB * TH * 4)
    else:
        TH = H_pad
        need = resident_need

    vmem_limit = int(min(max(need * 1.25, 32 * 1024 * 1024), vmem_budget))

    cost = pl.CostEstimate(
        flops=4 * B_pad * S_pad * H_pad,                  # two matmuls
        transcendentals=B_pad,                            # rsqrt per row
        bytes_accessed=2 * S_pad * H_pad * w_itemsize + 2 * B_pad * S_pad * 4,
    )

    def _resident_spec(shape, index_map):
        # Constant index_map -> never re-DMA'd: single-buffer to halve its VMEM.
        return pl.BlockSpec(shape, index_map, pipeline_mode=pl.Buffered(1))

    if not use_hsplit:
        kernel = functools.partial(_simba_kernel_resident, s_actual=S,
                                   compute_dtype=compute_dtype)
        out = pl.pallas_call(
            kernel,
            out_shape=jax.ShapeDtypeStruct((B_pad, S_pad), x.dtype),
            grid=(B_pad // TB,),
            in_specs=[
                pl.BlockSpec((TB, S_pad), lambda i: (i, 0)),        # x (pipelined)
                _resident_spec((1, S_pad), lambda i: (0, 0)),       # gamma
                _resident_spec((1, S_pad), lambda i: (0, 0)),       # beta
                _resident_spec((S_pad, H_pad), lambda i: (0, 0)),   # W1
                _resident_spec((1, H_pad), lambda i: (0, 0)),       # b1
                _resident_spec((H_pad, S_pad), lambda i: (0, 0)),   # W2
                _resident_spec((1, S_pad), lambda i: (0, 0)),       # b2
            ],
            out_specs=pl.BlockSpec((TB, S_pad), lambda i: (i, 0)),
            compiler_params=pltpu.CompilerParams(
                dimension_semantics=("parallel",),
                vmem_limit_bytes=vmem_limit,
            ),
            cost_estimate=cost,
        )(x_p, params["gamma"], params["beta"], params["w1"], params["b1"],
          params["w2"], params["b2"])
    else:
        kernel = functools.partial(_simba_kernel_hsplit, s_actual=S,
                                   compute_dtype=compute_dtype)
        out = pl.pallas_call(
            kernel,
            out_shape=jax.ShapeDtypeStruct((B_pad, S_pad), x.dtype),
            grid=(B_pad // TB, H_pad // TH),
            in_specs=[
                pl.BlockSpec((TB, S_pad), lambda i, k: (i, 0)),     # x
                _resident_spec((1, S_pad), lambda i, k: (0, 0)),    # gamma
                _resident_spec((1, S_pad), lambda i, k: (0, 0)),    # beta
                pl.BlockSpec((S_pad, TH), lambda i, k: (0, k)),     # W1 col block
                pl.BlockSpec((1, TH), lambda i, k: (0, k)),         # b1 block
                pl.BlockSpec((TH, S_pad), lambda i, k: (k, 0)),     # W2 row block
                _resident_spec((1, S_pad), lambda i, k: (0, 0)),    # b2
            ],
            out_specs=pl.BlockSpec((TB, S_pad), lambda i, k: (i, 0)),
            scratch_shapes=[
                pltpu.VMEM((TB, S_pad), compute_dtype),             # cached LN(x)
                pltpu.VMEM((TB, S_pad), jnp.float32),               # accumulator
            ],
            compiler_params=pltpu.CompilerParams(
                dimension_semantics=("parallel", "arbitrary"),
                vmem_limit_bytes=vmem_limit,
            ),
            cost_estimate=cost,
        )(x_p, params["gamma"], params["beta"], params["w1"], params["b1"],
          params["w2"], params["b2"])

    if B_pad != B or S_pad != S:
        out = out[:B, :S]
    return out


def simba_layer(x, gamma, beta, w1, b1, w2, b2, *, use_bf16: bool = True, **kw):
    """Convenience one-shot wrapper (prepare + apply). For repeated calls, call
    prepare_simba_params() once and reuse the result with simba_layer_apply()."""
    params = prepare_simba_params(gamma, beta, w1, b1, w2, b2, use_bf16=use_bf16)
    return simba_layer_apply(x, params, **kw)


# ----------------------------------------------------------------------------
# Reference + self-test
# ----------------------------------------------------------------------------
def he_init(key, fan_in, shape):
    std = jnp.sqrt(2.0 / fan_in)
    return std * jax.random.normal(key, shape, dtype=jnp.float32)


def reference(x, gamma, beta, w1, b1, w2, b2):
    mean = jnp.mean(x, axis=-1, keepdims=True)
    var = jnp.mean((x - mean) ** 2, axis=-1, keepdims=True)
    xn = (x - mean) / jnp.sqrt(var + LN_EPS) * gamma + beta
    h = jnp.maximum(xn @ w1 + b1, 0.0)
    return h @ w2 + b2 + x


def _make_inputs(key, B, S):
    H = 4 * S
    k_x, k_w1, k_b1, k_w2, k_b2 = jax.random.split(key, 5)
    x = jax.random.normal(k_x, (B, S), dtype=jnp.float32)
    gamma = jnp.ones((S,), dtype=jnp.float32)          # nn.LayerNorm defaults
    beta = jnp.zeros((S,), dtype=jnp.float32)
    w1 = he_init(k_w1, S, (S, H))
    b1 = 0.01 * jax.random.normal(k_b1, (H,), dtype=jnp.float32)
    w2 = he_init(k_w2, H, (H, S))
    b2 = 0.01 * jax.random.normal(k_b2, (S,), dtype=jnp.float32)
    return x, gamma, beta, w1, b1, w2, b2


if __name__ == "__main__":
    key = jax.random.PRNGKey(0)
    k1, k2, k3 = jax.random.split(key, 3)

    # Case 1: the original small shape (B=8, S=32 -> padded to 128 lanes).
    args = _make_inputs(k1, B=8, S=32)
    ref = reference(*args)

    out_bf16 = jax.block_until_ready(simba_layer(*args, use_bf16=True))
    assert out_bf16.shape == ref.shape
    assert jnp.allclose(out_bf16, ref, atol=3e-2, rtol=3e-2), "bf16 path mismatch"

    out_f32 = jax.block_until_ready(simba_layer(*args, use_bf16=False))
    assert jnp.allclose(out_f32, ref, atol=1e-4, rtol=1e-4), "f32 path mismatch"

    # Case 2: ragged shapes (B, S not aligned) -> masked LayerNorm + padding.
    args2 = _make_inputs(k2, B=13, S=48)
    ref2 = reference(*args2)
    out2 = jax.block_until_ready(simba_layer(*args2, use_bf16=True))
    assert out2.shape == ref2.shape
    assert jnp.allclose(out2, ref2, atol=3e-2, rtol=3e-2), "padded-shape mismatch"

    # Case 2b: force the H-split (accumulator) path on the same inputs.
    params2 = prepare_simba_params(*args2[1:], use_bf16=True)
    out2h = jax.block_until_ready(
        simba_layer_apply(args2[0], params2, force_h_split=True, block_h=128))
    assert jnp.allclose(out2h, ref2, atol=3e-2, rtol=3e-2), "H-split path mismatch"

    # Case 3: awkward batch (B=260) -> balanced batch tiling, multi-step grid,
    # reusing prepared (pre-padded / pre-cast) params across calls.
    args3 = _make_inputs(k3, B=260, S=32)
    ref3 = reference(*args3)
    params3 = prepare_simba_params(*args3[1:], use_bf16=True)
    out3 = jax.block_until_ready(simba_layer_apply(args3[0], params3))
    assert out3.shape == ref3.shape
    assert jnp.allclose(out3, ref3, atol=3e-2, rtol=3e-2), "balanced-tiling mismatch"

    print("KERNEL_OK")
</pallas_src>

<mosaic_0001>
module attributes {stable_mosaic.version = 11 : i64} {
  func.func @_simba_kernel_resident(%arg0: i32, %arg1: memref<8x128xf32, #tpu.memory_space<vmem>>, %arg2: memref<1x128xf32, #tpu.memory_space<vmem>>, %arg3: memref<1x128xf32, #tpu.memory_space<vmem>>, %arg4: memref<128x128xbf16, #tpu.memory_space<vmem>>, %arg5: memref<1x128xf32, #tpu.memory_space<vmem>>, %arg6: memref<128x128xbf16, #tpu.memory_space<vmem>>, %arg7: memref<1x128xf32, #tpu.memory_space<vmem>>, %arg8: memref<8x128xf32, #tpu.memory_space<vmem>>) attributes {dimension_semantics = [#tpu.dimension_semantics<parallel>], iteration_bounds = array<i64: 1>, scalar_prefetch = 0 : i64, scratch_operands = 0 : i64, tpu.core_type = #tpu.core_type<tc>, window_params = [{transform_indices = @transform_0, window_bounds = array<i64: 8, 128>}, {pipeline_mode = #tpu.pipeline_mode<synchronous>, transform_indices = @transform_1, window_bounds = array<i64: 1, 128>}, {pipeline_mode = #tpu.pipeline_mode<synchronous>, transform_indices = @transform_2, window_bounds = array<i64: 1, 128>}, {pipeline_mode = #tpu.pipeline_mode<synchronous>, transform_indices = @transform_3, window_bounds = array<i64: 128, 128>}, {pipeline_mode = #tpu.pipeline_mode<synchronous>, transform_indices = @transform_4, window_bounds = array<i64: 1, 128>}, {pipeline_mode = #tpu.pipeline_mode<synchronous>, transform_indices = @transform_5, window_bounds = array<i64: 128, 128>}, {pipeline_mode = #tpu.pipeline_mode<synchronous>, transform_indices = @transform_6, window_bounds = array<i64: 1, 128>}, {transform_indices = @transform_7, window_bounds = array<i64: 8, 128>}]} {
    %c0 = arith.constant 0 : index
    %c0_0 = arith.constant 0 : index
    %0 = vector.load %arg1[%c0, %c0_0] : memref<8x128xf32, #tpu.memory_space<vmem>>, vector<8x128xf32>
    %c0_1 = arith.constant 0 : index
    %c0_2 = arith.constant 0 : index
    %1 = vector.load %arg2[%c0_1, %c0_2] : memref<1x128xf32, #tpu.memory_space<vmem>>, vector<1x128xf32>
    %c0_3 = arith.constant 0 : index
    %c0_4 = arith.constant 0 : index
    %2 = vector.load %arg3[%c0_3, %c0_4] : memref<1x128xf32, #tpu.memory_space<vmem>>, vector<1x128xf32>
    %cst = arith.constant dense<0.000000e+00> : vector<8xf32>
    %3 = vector.multi_reduction <add>, %0, %cst [1] : vector<8x128xf32> to vector<8xf32>
    %4 = vector.shape_cast %3 : vector<8xf32> to vector<8x1xf32>
    %cst_5 = arith.constant 3.125000e-02 : f32
    %5 = vector.broadcast %cst_5 : f32 to vector<8x1xf32>
    %6 = arith.mulf %4, %5 : vector<8x1xf32>
    %7 = tpu.iota {dimensions = array<i32: 1>} : vector<8x128xi32>
    %c32_i32 = arith.constant 32 : i32
    %8 = vector.broadcast %c32_i32 : i32 to vector<8x128xi32>
    %9 = arith.cmpi slt, %7, %8 : vector<8x128xi32>
    %10 = arith.extui %9 : vector<8x128xi1> to vector<8x128xi32>
    %11 = arith.sitofp %10 : vector<8x128xi32> to vector<8x128xf32>
    %12 = vector.broadcast %6 : vector<8x1xf32> to vector<8x128xf32>
    %13 = arith.subf %0, %12 : vector<8x128xf32>
    %14 = arith.mulf %13, %11 : vector<8x128xf32>
    %15 = arith.mulf %14, %14 : vector<8x128xf32>
    %cst_6 = arith.constant dense<0.000000e+00> : vector<8xf32>
    %16 = vector.multi_reduction <add>, %15, %cst_6 [1] : vector<8x128xf32> to vector<8xf32>
    %17 = vector.shape_cast %16 : vector<8xf32> to vector<8x1xf32>
    %cst_7 = arith.constant 3.125000e-02 : f32
    %18 = vector.broadcast %cst_7 : f32 to vector<8x1xf32>
    %19 = arith.mulf %17, %18 : vector<8x1xf32>
    %cst_8 = arith.constant 9.99999974E-6 : f32
    %20 = vector.broadcast %cst_8 : f32 to vector<8x1xf32>
    %21 = arith.addf %19, %20 : vector<8x1xf32>
    %22 = math.rsqrt %21 : vector<8x1xf32>
    %23 = vector.broadcast %22 : vector<8x1xf32> to vector<8x128xf32>
    %24 = arith.mulf %14, %23 : vector<8x128xf32>
    %25 = vector.broadcast %1 : vector<1x128xf32> to vector<8x128xf32>
    %26 = arith.mulf %24, %25 : vector<8x128xf32>
    %27 = vector.broadcast %2 : vector<1x128xf32> to vector<8x128xf32>
    %28 = arith.addf %26, %27 : vector<8x128xf32>
    %29 = arith.truncf %28 : vector<8x128xf32> to vector<8x128xbf16>
    %c0_9 = arith.constant 0 : index
    %c0_10 = arith.constant 0 : index
    %30 = vector.load %arg4[%c0_9, %c0_10] : memref<128x128xbf16, #tpu.memory_space<vmem>>, vector<128x128xbf16>
    %cst_11 = arith.constant dense<0.000000e+00> : vector<8x128xf32>
    %31 = tpu.matmul %29, %30, %cst_11 {dimension_numbers = #tpu.dot_dimension_numbers<[1], [0], [0], [1], [0, 0, 1, 1], [], []>} : vector<8x128xbf16>, vector<128x128xbf16>, vector<8x128xf32> -> vector<8x128xf32>
    %c0_12 = arith.constant 0 : index
    %c0_13 = arith.constant 0 : index
    %32 = vector.load %arg5[%c0_12, %c0_13] : memref<1x128xf32, #tpu.memory_space<vmem>>, vector<1x128xf32>
    %33 = vector.broadcast %32 : vector<1x128xf32> to vector<8x128xf32>
    %34 = arith.addf %31, %33 : vector<8x128xf32>
    %cst_14 = arith.constant 0.000000e+00 : f32
    %35 = vector.broadcast %cst_14 : f32 to vector<8x128xf32>
    %36 = arith.maximumf %34, %35 : vector<8x128xf32>
    %37 = arith.truncf %36 : vector<8x128xf32> to vector<8x128xbf16>
    %c0_15 = arith.constant 0 : index
    %c0_16 = arith.constant 0 : index
    %38 = vector.load %arg6[%c0_15, %c0_16] : memref<128x128xbf16, #tpu.memory_space<vmem>>, vector<128x128xbf16>
    %cst_17 = arith.constant dense<0.000000e+00> : vector<8x128xf32>
    %39 = tpu.matmul %37, %38, %cst_17 {dimension_numbers = #tpu.dot_dimension_numbers<[1], [0], [0], [1], [0, 0, 1, 1], [], []>} : vector<8x128xbf16>, vector<128x128xbf16>, vector<8x128xf32> -> vector<8x128xf32>
    %c0_18 = arith.constant 0 : index
    %c0_19 = arith.constant 0 : index
    %40 = vector.load %arg7[%c0_18, %c0_19] : memref<1x128xf32, #tpu.memory_space<vmem>>, vector<1x128xf32>
    %41 = vector.broadcast %40 : vector<1x128xf32> to vector<8x128xf32>
    %42 = arith.addf %39, %41 : vector<8x128xf32>
    %43 = arith.addf %42, %0 : vector<8x128xf32>
    %c0_20 = arith.constant 0 : index
    %c0_21 = arith.constant 0 : index
    %44 = vector.load %arg8[%c0_20, %c0_21] : memref<8x128xf32, #tpu.memory_space<vmem>>, vector<8x128xf32>
    tpu.vector_store %arg8[%c0_20, %c0_21], %43 {strides = array<i32>} : memref<8x128xf32, #tpu.memory_space<vmem>>, vector<8x128xf32>,
    return
  }
  func.func @transform_0(%arg0: i32) -> (i32, i32) {
    %c0_i32 = arith.constant 0 : i32
    %c0_i32_0 = arith.constant 0 : i32
    return %arg0, %c0_i32 : i32, i32
  }
  func.func @transform_1(%arg0: i32) -> (i32, i32) {
    %c0_i32 = arith.constant 0 : i32
    %c0_i32_0 = arith.constant 0 : i32
    %c0_i32_1 = arith.constant 0 : i32
    return %c0_i32, %c0_i32_0 : i32, i32
  }
  func.func @transform_2(%arg0: i32) -> (i32, i32) {
    %c0_i32 = arith.constant 0 : i32
    %c0_i32_0 = arith.constant 0 : i32
    %c0_i32_1 = arith.constant 0 : i32
    return %c0_i32, %c0_i32_0 : i32, i32
  }
  func.func @transform_3(%arg0: i32) -> (i32, i32) {
    %c0_i32 = arith.constant 0 : i32
    %c0_i32_0 = arith.constant 0 : i32
    %c0_i32_1 = arith.constant 0 : i32
    return %c0_i32, %c0_i32_0 : i32, i32
  }
  func.func @transform_4(%arg0: i32) -> (i32, i32) {
    %c0_i32 = arith.constant 0 : i32
    %c0_i32_0 = arith.constant 0 : i32
    %c0_i32_1 = arith.constant 0 : i32
    return %c0_i32, %c0_i32_0 : i32, i32
  }
  func.func @transform_5(%arg0: i32) -> (i32, i32) {
    %c0_i32 = arith.constant 0 : i32
    %c0_i32_0 = arith.constant 0 : i32
    %c0_i32_1 = arith.constant 0 : i32
    return %c0_i32, %c0_i32_0 : i32, i32
  }
  func.func @transform_6(%arg0: i32) -> (i32, i32) {
    %c0_i32 = arith.constant 0 : i32
    %c0_i32_0 = arith.constant 0 : i32
    %c0_i32_1 = arith.constant 0 : i32
    return %c0_i32, %c0_i32_0 : i32, i32
  }
  func.func @transform_7(%arg0: i32) -> (i32, i32) {
    %c0_i32 = arith.constant 0 : i32
    %c0_i32_0 = arith.constant 0 : i32
    return %arg0, %c0_i32 : i32, i32
  }
}

</mosaic_0001>

<llo_original>
// kernel: tpu_custom_call.1
$region0: #{tpu_custom_call.1}
  #allocation0 [shape = 'u32[]', space=smem, size = 0x4, offset = 0x4, fixed_abs, tag = 'smem constant byte address 0x4 - core index']
  #allocation1 [shape = 'u32[72,128]{1,0:T(1,128)}', space=vmem, size = 0x9000, scoped, tag = 'internal scratch']
  %s0 = inlined_call_operand.hbm [shape: f32[8,128], index: 0, kind: input, shape index: {}]
  %s1 = inlined_call_operand.hbm [shape: f32[1,128], index: 1, kind: input, shape index: {}]
  %s2 = inlined_call_operand.vmem [shape: f32[1,128], index: 2, kind: input, shape index: {}]
  %s3 = inlined_call_operand.hbm [shape: bf16[128,128], index: 3, kind: input, shape index: {}]
  %s4 = inlined_call_operand.vmem [shape: f32[1,128], index: 4, kind: input, shape index: {}]
  %s5 = inlined_call_operand.hbm [shape: bf16[128,128], index: 5, kind: input, shape index: {}]
  %s6 = inlined_call_operand.vmem [shape: f32[1,128], index: 6, kind: input, shape index: {}]
  %s7 = inlined_call_operand.hbm [shape: f32[8,128], index: 7, kind: output, shape index: {}]
  %s8 = sld [smem:[#allocation0]]
  $region54: #{tpu_custom_call.1} parent=0
    _
  %s10 = ssub.s32 1, %s8
  %s11 = scalar_select 0, %s10, %s8
  $region1: #{tpu_custom_call.1} parent=0
    #allocation2 [shape = 'u8[4096]{0}', space=vmem, size = 0x1000, scoped, tag = 'input window, operand 0, single buffered']
    #allocation3 [shape = 's32[1]{0}', space=sflag, size = 0x4, scoped, tag = 'scoped memory for tpu_custom_call.1']
    #allocation4 [shape = 's32[1]{0}', space=sflag, size = 0x4, scoped, tag = 'scoped memory for tpu_custom_call.1']
    #allocation5 [shape = 'u8[512]{0}', space=vmem, size = 0x400, scoped, tag = 'input window, operand 1, single buffered']
    #allocation6 [shape = 's32[1]{0}', space=sflag, size = 0x4, scoped, tag = 'scoped memory for tpu_custom_call.1']
    #allocation7 [shape = 'u8[32768]{0}', space=vmem, size = 0x8000, scoped, tag = 'input window, operand 3, single buffered']
    #allocation8 [shape = 'u8[32768]{0}', space=vmem, size = 0x8000, scoped, tag = 'input window, operand 5, single buffered']
    #allocation9 [shape = 's32[1]{0}', space=sflag, size = 0x4, scoped, tag = 'scoped memory for tpu_custom_call.1']
    #allocation10 [shape = 'u8[4096]{0}', space=vmem, size = 0x1000, scoped, tag = 'output window, operand 0, single buffered']
    %12 = vsyncpa [#allocation3], 0
    %13 = vsyncpa [#allocation6], 0
    %14 = vsyncpa [#allocation9], 0
    %15 = vsyncpa [#allocation4], 0
    // Predicated region
    $region2: #{tpu_custom_call.1} parent=1 // pred_check
      _
    $region3: #{tpu_custom_call.1} parent=1 // pred_check_branch
      %17 = sbr.rel (0) target = $region5
    $region4: #{tpu_custom_call.1} parent=1 // pred_region
      %19 = vsyncadd [#allocation3], 0
      %s21 = sshll.u32 %s0, 4
      %s22 = int_to_ptr.hbm [resolvable:$true] %s21
      %s23 = sshll.u32 [#allocation2], 4
      %s24 = int_to_ptr.vmem [resolvable:$true] %s23
      %26 = dma.hbm_to_vmem [thread:$0]  %s22, 128, %s24, [#allocation3]
    $region5: #{tpu_custom_call.1} parent=1 // pred_fallthru
      _
    // Predicated region
    $region6: #{tpu_custom_call.1} parent=1 // pred_check
      _
    $region7: #{tpu_custom_call.1} parent=1 // pred_check_branch
      %28 = sbr.rel (0) target = $region9
    $region8: #{tpu_custom_call.1} parent=1 // pred_region
      %30 = vsyncadd [#allocation6], 0
      %s32 = sshll.u32 %s1, 4
      %s33 = int_to_ptr.hbm [resolvable:$true] %s32
      %s34 = sshll.u32 [#allocation5], 4
      %s35 = int_to_ptr.vmem [resolvable:$true] %s34
      %37 = dma.hbm_to_vmem [thread:$0]  %s33, 16, %s35, [#allocation6]
    $region9: #{tpu_custom_call.1} parent=1 // pred_fallthru
      _
    // Predicated region
    $region10: #{tpu_custom_call.1} parent=1 // pred_check
      _
    $region11: #{tpu_custom_call.1} parent=1 // pred_check_branch
      %39 = sbr.rel (0) target = $region13
    $region12: #{tpu_custom_call.1} parent=1 // pred_region
      _
    $region13: #{tpu_custom_call.1} parent=1 // pred_fallthru
      _
    // Predicated region
    $region14: #{tpu_custom_call.1} parent=1 // pred_check
      _
    $region15: #{tpu_custom_call.1} parent=1 // pred_check_branch
      %41 = sbr.rel (0) target = $region17
    $region16: #{tpu_custom_call.1} parent=1 // pred_region
      %43 = vsyncadd [#allocation6], 0
      %s44 = sshll.u32 %s3, 4
      %s45 = int_to_ptr.hbm [resolvable:$true] %s44
      %s46 = sshll.u32 [#allocation7], 4
      %s47 = int_to_ptr.vmem [resolvable:$true] %s46
      %52 = dma.hbm_to_vmem [thread:$0]  %s45, 1024, %s47, [#allocation6], 64, 64, 4
    $region17: #{tpu_custom_call.1} parent=1 // pred_fallthru
      _
    // Predicated region
    $region18: #{tpu_custom_call.1} parent=1 // pred_check
      _
    $region19: #{tpu_custom_call.1} parent=1 // pred_check_branch
      %54 = sbr.rel (0) target = $region21
    $region20: #{tpu_custom_call.1} parent=1 // pred_region
      _
    $region21: #{tpu_custom_call.1} parent=1 // pred_fallthru
      _
    // Predicated region
    $region22: #{tpu_custom_call.1} parent=1 // pred_check
      _
    $region23: #{tpu_custom_call.1} parent=1 // pred_check_branch
      %56 = sbr.rel (0) target = $region25
    $region24: #{tpu_custom_call.1} parent=1 // pred_region
      %58 = vsyncadd [#allocation9], 0
      %s59 = sshll.u32 %s5, 4
      %s60 = int_to_ptr.hbm [resolvable:$true] %s59
      %s61 = sshll.u32 [#allocation8], 4
      %s62 = int_to_ptr.vmem [resolvable:$true] %s61
      %67 = dma.hbm_to_vmem [thread:$0]  %s60, 1024, %s62, [#allocation9], 64, 64, 4
    $region25: #{tpu_custom_call.1} parent=1 // pred_fallthru
      _
    // Predicated region
    $region26: #{tpu_custom_call.1} parent=1 // pred_check
      _
    $region27: #{tpu_custom_call.1} parent=1 // pred_check_branch
      %69 = sbr.rel (0) target = $region29
    $region28: #{tpu_custom_call.1} parent=1 // pred_region
      _
    $region29: #{tpu_custom_call.1} parent=1 // pred_fallthru
      _
    // Predicated region
    $region30: #{tpu_custom_call.1} parent=1 // pred_check
      _
    $region31: #{tpu_custom_call.1} parent=1 // pred_check_branch
      %71 = sbr.rel (0) target = $region33
    $region32: #{tpu_custom_call.1} parent=1 // pred_region
      %73 = dma.done [#allocation3], 128
    $region33: #{tpu_custom_call.1} parent=1 // pred_fallthru
      _
    // Predicated region
    $region34: #{tpu_custom_call.1} parent=1 // pred_check
      _
    $region35: #{tpu_custom_call.1} parent=1 // pred_check_branch
      %75 = sbr.rel (0) target = $region37
    $region36: #{tpu_custom_call.1} parent=1 // pred_region
      %77 = dma.done [#allocation6], 16
    $region37: #{tpu_custom_call.1} parent=1 // pred_fallthru
      _
    // Predicated region
    $region38: #{tpu_custom_call.1} parent=1 // pred_check
      _
    $region39: #{tpu_custom_call.1} parent=1 // pred_check_branch
      %79 = sbr.rel (0) target = $region41
    $region40: #{tpu_custom_call.1} parent=1 // pred_region
      %81 = dma.done [#allocation6], 1024
    $region41: #{tpu_custom_call.1} parent=1 // pred_fallthru
      _
    // Predicated region
    $region42: #{tpu_custom_call.1} parent=1 // pred_check
      _
    $region43: #{tpu_custom_call.1} parent=1 // pred_check_branch
      %83 = sbr.rel (0) target = $region45
    $region44: #{tpu_custom_call.1} parent=1 // pred_region
      %85 = dma.done [#allocation9], 1024
    $region45: #{tpu_custom_call.1} parent=1 // pred_fallthru
      _
    %v86 = vld [vmem:[#allocation2] sm:$0xff]
    %v87 = vld [vmem:[#allocation5] sm:$0x1]
    %v88 = vld [vmem:[%s2] sm:$0x1]
    %89 = vadd.xlane.f32.xlu0 %v86
    %v90 = vpop.xlane.xlu0 %89
    %v91 = vmul.f32 %v90, 0.03125
    %v92 = vlaneseq
    %v93 = vand.u32 %v92, 127
    %vm94 = vcmp.lt.s32.totalorder %v93, 32
    %v95 = vsel %vm94, 1, 0
    %v96 = vcvt.s32.f32 %v95
    %v97 = vsub.f32 %v86, %v91
    %v98 = vmul.f32 %v97, %v96
    %v99 = vmul.f32 %v98, %v98
    %100 = vadd.xlane.f32.xlu0 %v99
    %v101 = vpop.xlane.xlu0 %100
    %v102 = vmul.f32 %v101, 0.03125
    %v103 = vadd.f32 %v102, 1e-05
    %v104 = vrsqrt.pop %v103
    %v105 = vmul.f32 %v104, %v103
    %v106 = vmul.f32 %v105, %v104
    %v107 = vmul.f32 0.5, %v106
    %v108 = vsub.f32 1.5, %v107
    %v109 = vmul.f32 %v104, %v108
    %vm110 = vweird.f32 %v103
    %vm111 = vweird.f32 %v104
    %vm112 = vmor %vm110, %vm111
    %v113 = vsel %vm112, %v104, %v109
    %v114 = vmul.f32 %v98, %v113
    %v116 = vperm.slane %v87, 0
    %v118 = vmul.f32 %v114, %v116
    %v120 = vperm.slane %v88, 0
    %v122 = vadd.f32 %v118, %v120
    %v123 = vpack.c.bf16 %v122, %v122
    %v124 = vld [vmem:[#allocation7] sm:$0xf]
    %v125 = vld [vmem:[#allocation7 + $0x4] sm:$0xf]
    %v126 = vld [vmem:[#allocation7 + $0x8] sm:$0xf]
    %v127 = vld [vmem:[#allocation7 + $0xc] sm:$0xf]
    %v128 = vld [vmem:[#allocation7 + $0x10] sm:$0xf]
    %v129 = vld [vmem:[#allocation7 + $0x14] sm:$0xf]
    %v130 = vld [vmem:[#allocation7 + $0x18] sm:$0xf]
    %v131 = vld [vmem:[#allocation7 + $0x1c] sm:$0xf]
    %v132 = vld [vmem:[#allocation7 + $0x20] sm:$0xf]
    %v133 = vld [vmem:[#allocation7 + $0x24] sm:$0xf]
    %v134 = vld [vmem:[#allocation7 + $0x28] sm:$0xf]
    %v135 = vld [vmem:[#allocation7 + $0x2c] sm:$0xf]
    %v136 = vld [vmem:[#allocation7 + $0x30] sm:$0xf]
    %v137 = vld [vmem:[#allocation7 + $0x34] sm:$0xf]
    %v138 = vld [vmem:[#allocation7 + $0x38] sm:$0xf]
    %v139 = vld [vmem:[#allocation7 + $0x3c] sm:$0xf]
    %v140 = vld [vmem:[%s4] sm:$0x1]
    %v142 = vperm.slane %v140, 0
    %v160 = vunpack.c.l.b16 %v124
    %v161 = vunpack.c.l.b16 %v125
    %v162 = vunpack.c.l.b16 %v126
    %v163 = vunpack.c.l.b16 %v127
    %v164 = vunpack.c.l.b16 %v128
    %v165 = vunpack.c.l.b16 %v129
    %v166 = vunpack.c.l.b16 %v130
    %v167 = vunpack.c.l.b16 %v131
    %v168 = vunpack.c.l.b16 %v132
    %v169 = vunpack.c.l.b16 %v133
    %v170 = vunpack.c.l.b16 %v134
    %v171 = vunpack.c.l.b16 %v135
    %v172 = vunpack.c.l.b16 %v136
    %v173 = vunpack.c.l.b16 %v137
    %v174 = vunpack.c.l.b16 %v138
    %v175 = vunpack.c.l.b16 %v139
    %v176 = vpack.c.b16 %v161, %v160
    %v177 = vpack.c.b16 %v163, %v162
    %v178 = vpack.c.b16 %v165, %v164
    %v179 = vpack.c.b16 %v167, %v166
    %v180 = vpack.c.b16 %v169, %v168
    %v181 = vpack.c.b16 %v171, %v170
    %v182 = vpack.c.b16 %v173, %v172
    %v183 = vpack.c.b16 %v175, %v174
    %192 = vmatpush.bf16.msra.mxu0 %v183
    %193 = vmatpush.bf16.msra.mxu0 %v182
    %194 = vmatpush.bf16.msra.mxu0 %v181
    %195 = vmatpush.bf16.msra.mxu0 %v180
    %196 = vmatpush.bf16.msra.mxu0 %v179
    %197 = vmatpush.bf16.msra.mxu0 %v178
    %198 = vmatpush.bf16.msra.mxu0 %v177
    %199 = vmatpush.bf16.msra.mxu0 %v176
    %200 = vmatmul.bf16.gmra.mxu0 %v123
    %v201 = vpop.f32.mrf.mxu0
    %v202 = vadd.f32 %v142, %v201
    %v203 = vpop.f32.mrf.mxu0
    %204 = vdwg.mxu0
    %v205 = vmax.f32 %v202, 0.0
    %v206 = vpack.c.bf16 %v205, %v205
    %v207 = vld [vmem:[#allocation8] sm:$0xf]
    %v208 = vld [vmem:[#allocation8 + $0x4] sm:$0xf]
    %v209 = vld [vmem:[#allocation8 + $0x8] sm:$0xf]
    %v210 = vld [vmem:[#allocation8 + $0xc] sm:$0xf]
    %v211 = vld [vmem:[#allocation8 + $0x10] sm:$0xf]
    %v212 = vld [vmem:[#allocation8 + $0x14] sm:$0xf]
    %v213 = vld [vmem:[#allocation8 + $0x18] sm:$0xf]
    %v214 = vld [vmem:[#allocation8 + $0x1c] sm:$0xf]
    %v215 = vld [vmem:[#allocation8 + $0x20] sm:$0xf]
    %v216 = vld [vmem:[#allocation8 + $0x24] sm:$0xf]
    %v217 = vld [vmem:[#allocation8 + $0x28] sm:$0xf]
    %v218 = vld [vmem:[#allocation8 + $0x2c] sm:$0xf]
    %v219 = vld [vmem:[#allocation8 + $0x30] sm:$0xf]
    %v220 = vld [vmem:[#allocation8 + $0x34] sm:$0xf]
    %v221 = vld [vmem:[#allocation8 + $0x38] sm:$0xf]
    %v222 = vld [vmem:[#allocation8 + $0x3c] sm:$0xf]
    %v223 = vld [vmem:[%s6] sm:$0x1]
    %v225 = vperm.slane %v223, 0
    %v243 = vunpack.c.l.b16 %v207
    %v244 = vunpack.c.l.b16 %v208
    %v245 = vunpack.c.l.b16 %v209
    %v246 = vunpack.c.l.b16 %v210
    %v247 = vunpack.c.l.b16 %v211
    %v248 = vunpack.c.l.b16 %v212
    %v249 = vunpack.c.l.b16 %v213
    %v250 = vunpack.c.l.b16 %v214
    %v251 = vunpack.c.l.b16 %v215
    %v252 = vunpack.c.l.b16 %v216
    %v253 = vunpack.c.l.b16 %v217
    %v254 = vunpack.c.l.b16 %v218
    %v255 = vunpack.c.l.b16 %v219
    %v256 = vunpack.c.l.b16 %v220
    %v257 = vunpack.c.l.b16 %v221
    %v258 = vunpack.c.l.b16 %v222
    %v259 = vpack.c.b16 %v244, %v243
    %v260 = vpack.c.b16 %v246, %v245
    %v261 = vpack.c.b16 %v248, %v247
    %v262 = vpack.c.b16 %v250, %v249
    %v263 = vpack.c.b16 %v252, %v251
    %v264 = vpack.c.b16 %v254, %v253
    %v265 = vpack.c.b16 %v256, %v255
    %v266 = vpack.c.b16 %v258, %v257
    %275 = vmatpush.bf16.msra.mxu0 %v266
    %276 = vmatpush.bf16.msra.mxu0 %v265
    %277 = vmatpush.bf16.msra.mxu0 %v264
    %278 = vmatpush.bf16.msra.mxu0 %v263
    %279 = vmatpush.bf16.msra.mxu0 %v262
    %280 = vmatpush.bf16.msra.mxu0 %v261
    %281 = vmatpush.bf16.msra.mxu0 %v260
    %282 = vmatpush.bf16.msra.mxu0 %v259
    %283 = vmatmul.bf16.gmra.mxu0 %v206
    %v284 = vpop.f32.mrf.mxu0
    %v285 = vadd.f32 %v225, %v284
    %v286 = vpop.f32.mrf.mxu0
    %287 = vdwg.mxu0
    %v288 = vadd.f32 %v285, %v86
    %289 = vst [vmem:[#allocation10] sm:$0xff] %v288
    // Predicated region
    $region46: #{tpu_custom_call.1} parent=1 // pred_check
      _
    $region47: #{tpu_custom_call.1} parent=1 // pred_check_branch
      %291 = sbr.rel (0) target = $region49
    $region48: #{tpu_custom_call.1} parent=1 // pred_region
      %293 = vsyncadd [#allocation4], 0
      %s295 = sshll.u32 [#allocation10], 4
      %s296 = int_to_ptr.vmem [resolvable:$true] %s295
      %s297 = sshll.u32 %s7, 4
      %s298 = int_to_ptr.hbm [resolvable:$true] %s297
      %300 = dma.vmem_to_hbm [thread:$0]  %s296, 128, %s298, [#allocation4]
    $region49: #{tpu_custom_call.1} parent=1 // pred_fallthru
      _
    // Predicated region
    $region50: #{tpu_custom_call.1} parent=1 // pred_check
      _
    $region51: #{tpu_custom_call.1} parent=1 // pred_check_branch
      %302 = sbr.rel (0) target = $region53
    $region52: #{tpu_custom_call.1} parent=1 // pred_region
      %304 = dma.done [#allocation4], 128
    $region53: #{tpu_custom_call.1} parent=1 // pred_fallthru
      _
    %305 = vsyncpa [#allocation3], 1
    %306 = vsyncpa [#allocation6], 1
    %307 = vsyncpa [#allocation9], 1
    %308 = vsyncpa [#allocation4], 1

</llo_original>
